<compile_context>
chip_gen: v6e
topology: v6e:2x2x1
jax: 0.10.0
libtpu: 0.0.40
codegen_flags: <defaults>
</compile_context>

<pallas_src>
import functools

import jax
import jax.numpy as jnp
import numpy as np
from jax.experimental import pallas as pl
from jax.experimental.pallas import tpu as pltpu


def _hetero_sage_kernel(x_full_ref, x_tile_ref, a_ref, wc_ref, bc_ref,
                        wsm_ref, blm_ref, o_ref, h_cache_ref, *, num_types):
    """One grid step == (row tile i, edge type t).

    Accumulates the neighbor path of each edge type straight into the
    VMEM-resident output tile; on the last edge type, scales by 1/T and adds
    the hoisted self path.
    """
    # All grid queries at the top level of the kernel (never inside pl.when).
    i = pl.program_id(0)
    t = pl.program_id(1)

    @pl.when(t == 0)
    def _init():
        o_ref[...] = jnp.zeros_like(o_ref)

    # Per-type transformed features, computed once (first row tile) and cached:
    #   h_t = x @ (Wn_t @ Wa_t) + bn_t @ Wa_t        (reassociated neighbor path)
    @pl.when(i == 0)
    def _fill_cache():
        h = (jnp.dot(x_full_ref[...], wc_ref[0],
                     preferred_element_type=jnp.float32)
             + bc_ref[0])                                   # (N_p, F_out_p) f32
        h_cache_ref[t] = h.astype(h_cache_ref.dtype)        # bf16 cache

    # Mean over incoming edges of this type for this row tile
    # (row-normalized adjacency tile, bf16) -> accumulate into the output tile.
    o_ref[...] += jnp.dot(a_ref[0], h_cache_ref[t],
                          preferred_element_type=jnp.float32)

    @pl.when(t == num_types - 1)
    def _finalize():
        # Hoisted self path: mean_t(x @ Ws_t + b_t) = x @ mean_t(Ws) + mean_t(b)
        self_out = (jnp.dot(x_tile_ref[...], wsm_ref[...],
                            preferred_element_type=jnp.float32)
                    + blm_ref[...])
        o_ref[...] = o_ref[...] * (1.0 / num_types) + self_out


def _round_up(v, m):
    return ((v + m - 1) // m) * m


def hetero_conv_pallas(x, adj_norm, wn, bn, ws, wa, bl, *,
                       row_tile=256, vmem_limit_bytes=None):
    """HeteroConv(mean) over stacked SageConvs.

    x        : (N, F_in) float32 node features
    adj_norm : (T, N, N) float32 row-normalized adjacency per edge type
               (adj_norm[t, dst, src] = 1/deg_t(dst))
    wn, bn   : (T, F_in, F_in), (T, 1, F_in)       neigh_linear params
    ws, wa   : (T, F_in, F_out), (T, F_in, F_out)  linear split on concat([x,agg])
    bl       : (T, 1, F_out)
    returns  : (N, F_out) float32
    """
    N, F_in = x.shape
    T = adj_norm.shape[0]
    F_out = ws.shape[-1]

    # --- algebraic precompute (tiny, O(T*F^2)) ------------------------------
    w_comb = jnp.einsum('tik,tko->tio', wn, wa)           # (T, F_in, F_out)
    b_comb = jnp.einsum('tik,tko->tio', bn, wa)           # (T, 1,   F_out)
    ws_mean = ws.mean(axis=0)                             # (F_in, F_out)
    bl_mean = bl.mean(axis=0)                             # (1,    F_out)

    # --- lane/sublane-friendly padding & row tiling (bf16 => sublane 16) ----
    F_in_p = _round_up(F_in, 128)
    F_out_p = _round_up(F_out, 128)
    n_al = _round_up(N, 16)
    tm = min(_round_up(row_tile, 16), n_al)
    N_p = _round_up(n_al, tm)
    num_row_tiles = N_p // tm

    bf16 = jnp.bfloat16
    x_p = jnp.zeros((N_p, F_in_p), bf16).at[:N, :F_in].set(x.astype(bf16))
    a_p = jnp.zeros((T, N_p, N_p), bf16).at[:, :N, :N].set(adj_norm.astype(bf16))
    wc_p = jnp.zeros((T, F_in_p, F_out_p), bf16).at[:, :F_in, :F_out].set(
        w_comb.astype(bf16))
    bc_p = jnp.zeros((T, 1, F_out_p), jnp.float32).at[:, :, :F_out].set(b_comb)
    wsm_p = jnp.zeros((F_in_p, F_out_p), bf16).at[:F_in, :F_out].set(
        ws_mean.astype(bf16))
    blm_p = jnp.zeros((1, F_out_p), jnp.float32).at[:, :F_out].set(bl_mean)

    grid_spec = pltpu.PrefetchScalarGridSpec(
        num_scalar_prefetch=0,
        grid=(num_row_tiles, T),
        in_specs=[
            pl.BlockSpec((N_p, F_in_p), lambda i, t: (0, 0)),            # x (resident)
            pl.BlockSpec((tm, F_in_p), lambda i, t: (i, 0)),             # x row tile
            pl.BlockSpec((1, tm, N_p), lambda i, t: (t, i, 0)),          # A[t] row tile
            pl.BlockSpec((1, F_in_p, F_out_p), lambda i, t: (t, 0, 0)),  # W_comb[t]
            pl.BlockSpec((1, 1, F_out_p), lambda i, t: (t, 0, 0)),       # b_comb[t]
            pl.BlockSpec((F_in_p, F_out_p), lambda i, t: (0, 0)),        # mean_t(Ws)
            pl.BlockSpec((1, F_out_p), lambda i, t: (0, 0)),             # mean_t(b)
        ],
        out_specs=pl.BlockSpec((tm, F_out_p), lambda i, t: (i, 0)),
        scratch_shapes=[pltpu.VMEM((T, N_p, F_out_p), bf16)],            # h cache
    )

    # Advisory cost hint for XLA's scheduler around the custom call.
    flops = int(2 * T * N_p * F_in_p * F_out_p          # h per type (cached)
                + 2 * T * N_p * N_p * F_out_p           # A_t @ h_t
                + 2 * N_p * F_in_p * F_out_p)           # hoisted self path
    bytes_accessed = int(2 * x_p.size * 2 + a_p.size * 2 + wc_p.size * 2
                         + bc_p.size * 4 + wsm_p.size * 2 + blm_p.size * 4
                         + N_p * F_out_p * 4)
    cost = pl.CostEstimate(flops=flops, transcendentals=0,
                           bytes_accessed=bytes_accessed)

    kernel = functools.partial(_hetero_sage_kernel, num_types=T)

    out = pl.pallas_call(
        kernel,
        out_shape=jax.ShapeDtypeStruct((N_p, F_out_p), jnp.float32),
        grid_spec=grid_spec,
        compiler_params=pltpu.CompilerParams(
            # Row-tile axis kept "arbitrary": the h-cache is filled at row
            # tile 0 and reused by later tiles (cross-iteration dependency).
            dimension_semantics=("arbitrary", "arbitrary"),
            vmem_limit_bytes=vmem_limit_bytes),
        cost_estimate=cost,
    )(x_p, x_p, a_p, wc_p, bc_p, wsm_p, blm_p)

    return out[:N, :F_out]


def build_normalized_adjacency(edge_index, edge_type, num_nodes, num_etypes):
    """Glue (plain JAX): dense row-normalized adjacency per edge type.
    A[t, dst, src] = 1/deg_t(dst) for edges of type t (zero rows if no in-edges)."""
    src = edge_index[0]
    dst = edge_index[1]
    A = jnp.zeros((num_etypes, num_nodes, num_nodes), jnp.float32)
    A = A.at[edge_type, dst, src].add(1.0)
    deg = A.sum(axis=2, keepdims=True)
    A = jnp.where(deg > 0, A / jnp.maximum(deg, 1.0), 0.0)
    return A


def reference_forward(x, adj_norm, wn, bn, ws, wa, bl):
    """Pure-JAX f32 reference matching the PyTorch HeteroConv(mean)+SageConv math."""
    outs = []
    for t in range(adj_norm.shape[0]):
        h = x @ wn[t] + bn[t]
        agg = adj_norm[t] @ h
        outs.append(x @ ws[t] + agg @ wa[t] + bl[t])
    return jnp.stack(outs, 0).mean(axis=0)


if __name__ == "__main__":
    # Small, deterministic synthetic problem (exercises multiple row tiles).
    N = 48          # nodes
    F_IN = 32       # in_features
    F_OUT = 32      # out_features
    T = 3           # number of edge types
    E = 96          # number of edges

    key = jax.random.PRNGKey(0)
    keys = jax.random.split(key, 10)

    x = jax.random.normal(keys[0], (N, F_IN), dtype=jnp.float32)
    edge_index = jax.random.randint(keys[1], (2, E), 0, N, dtype=jnp.int32)
    edge_type = jax.random.randint(keys[2], (E,), 0, T, dtype=jnp.int32)

    # Deterministic parameter init (one SageConv per edge type). PyTorch stores
    # Linear weights as (out, in); we initialize the transposed (in, out)
    # matrices directly so the kernel computes x @ W.
    wn = 0.1 * jax.random.normal(keys[3], (T, F_IN, F_IN), dtype=jnp.float32)
    bn = 0.1 * jax.random.normal(keys[4], (T, 1, F_IN), dtype=jnp.float32)
    ws = 0.1 * jax.random.normal(keys[5], (T, F_IN, F_OUT), dtype=jnp.float32)
    wa = 0.1 * jax.random.normal(keys[6], (T, F_IN, F_OUT), dtype=jnp.float32)
    bl = 0.1 * jax.random.normal(keys[7], (T, 1, F_OUT), dtype=jnp.float32)

    adj_norm = build_normalized_adjacency(edge_index, edge_type, N, T)

    out = hetero_conv_pallas(x, adj_norm, wn, bn, ws, wa, bl, row_tile=16)
    out = jax.block_until_ready(out)

    ref = reference_forward(x, adj_norm, wn, bn, ws, wa, bl)
    # bf16 inputs + matmul reassociation change rounding slightly -> loose tol.
    np.testing.assert_allclose(np.asarray(out), np.asarray(ref),
                               rtol=2e-2, atol=2e-2)
    print("KERNEL_OK")
</pallas_src>

<mosaic_0001>
module attributes {stable_mosaic.version = 11 : i64} {
  func.func @_hetero_sage_kernel(%arg0: i32, %arg1: i32, %arg2: memref<48x128xbf16, #tpu.memory_space<vmem>>, %arg3: memref<16x128xbf16, #tpu.memory_space<vmem>>, %arg4: memref<1x16x48xbf16, #tpu.memory_space<vmem>>, %arg5: memref<1x128x128xbf16, #tpu.memory_space<vmem>>, %arg6: memref<1x1x128xf32, #tpu.memory_space<vmem>>, %arg7: memref<128x128xbf16, #tpu.memory_space<vmem>>, %arg8: memref<1x128xf32, #tpu.memory_space<vmem>>, %arg9: memref<16x128xf32, #tpu.memory_space<vmem>>, %arg10: memref<3x48x128xbf16, #tpu.memory_space<vmem>>) attributes {dimension_semantics = [#tpu.dimension_semantics<arbitrary>, #tpu.dimension_semantics<arbitrary>], iteration_bounds = array<i64: 3, 3>, scalar_prefetch = 0 : i64, scratch_operands = 1 : i64, tpu.core_type = #tpu.core_type<tc>, window_params = [{pipeline_mode = #tpu.pipeline_mode<synchronous>, transform_indices = @transform_0, window_bounds = array<i64: 48, 128>}, {transform_indices = @transform_1, window_bounds = array<i64: 16, 128>}, {transform_indices = @transform_2, window_bounds = array<i64: 1, 16, 48>}, {transform_indices = @transform_3, window_bounds = array<i64: 1, 128, 128>}, {transform_indices = @transform_4, window_bounds = array<i64: 1, 1, 128>}, {pipeline_mode = #tpu.pipeline_mode<synchronous>, transform_indices = @transform_5, window_bounds = array<i64: 128, 128>}, {pipeline_mode = #tpu.pipeline_mode<synchronous>, transform_indices = @transform_6, window_bounds = array<i64: 1, 128>}, {transform_indices = @transform_7, window_bounds = array<i64: 16, 128>}]} {
    %c0_i32 = arith.constant 0 : i32
    %0 = arith.cmpi eq, %arg1, %c0_i32 : i32
    %1 = arith.extui %0 : i1 to i32
    %c0_i32_0 = arith.constant 0 : i32
    %2 = arith.cmpi ne, %1, %c0_i32_0 : i32
    scf.if %2 {
      %cst_12 = arith.constant 0.000000e+00 : f32
      %18 = vector.broadcast %cst_12 : f32 to vector<16x128xf32>
      %c0_13 = arith.constant 0 : index
      %c0_14 = arith.constant 0 : index
      %19 = vector.load %arg9[%c0_13, %c0_14] : memref<16x128xf32, #tpu.memory_space<vmem>>, vector<16x128xf32>
      tpu.vector_store %arg9[%c0_13, %c0_14], %18 {strides = array<i32>} : memref<16x128xf32, #tpu.memory_space<vmem>>, vector<16x128xf32>,
    } else {
    }
    %c0_i32_1 = arith.constant 0 : i32
    %3 = arith.cmpi eq, %arg0, %c0_i32_1 : i32
    %4 = arith.extui %3 : i1 to i32
    %c0_i32_2 = arith.constant 0 : i32
    %5 = arith.cmpi ne, %4, %c0_i32_2 : i32
    scf.if %5 {
      %c0_12 = arith.constant 0 : index
      %c0_13 = arith.constant 0 : index
      %18 = vector.load %arg2[%c0_12, %c0_13] : memref<48x128xbf16, #tpu.memory_space<vmem>>, vector<48x128xbf16>
      %c0_14 = arith.constant 0 : index
      %c0_15 = arith.constant 0 : index
      %c0_16 = arith.constant 0 : index
      %19 = vector.load %arg5[%c0_14, %c0_15, %c0_16] : memref<1x128x128xbf16, #tpu.memory_space<vmem>>, vector<1x128x128xbf16>
      %20 = vector.shape_cast %19 : vector<1x128x128xbf16> to vector<128x128xbf16>
      %cst_17 = arith.constant dense<0.000000e+00> : vector<48x128xf32>
      %21 = tpu.matmul %18, %20, %cst_17 {dimension_numbers = #tpu.dot_dimension_numbers<[1], [0], [0], [1], [0, 0, 1, 1], [], []>} : vector<48x128xbf16>, vector<128x128xbf16>, vector<48x128xf32> -> vector<48x128xf32>
      %c0_18 = arith.constant 0 : index
      %c0_19 = arith.constant 0 : index
      %c0_20 = arith.constant 0 : index
      %22 = vector.load %arg6[%c0_18, %c0_19, %c0_20] : memref<1x1x128xf32, #tpu.memory_space<vmem>>, vector<1x1x128xf32>
      %23 = vector.shape_cast %22 : vector<1x1x128xf32> to vector<1x128xf32>
      %24 = vector.broadcast %23 : vector<1x128xf32> to vector<48x128xf32>
      %25 = arith.addf %21, %24 : vector<48x128xf32>
      %26 = arith.truncf %25 : vector<48x128xf32> to vector<48x128xbf16>
      %27 = arith.index_cast %arg1 : i32 to index
      %c0_21 = arith.constant 0 : index
      %c0_22 = arith.constant 0 : index
      %28 = vector.load %arg10[%27, %c0_21, %c0_22] : memref<3x48x128xbf16, #tpu.memory_space<vmem>>, vector<1x48x128xbf16>
      %29 = vector.shape_cast %28 : vector<1x48x128xbf16> to vector<48x128xbf16>
      %30 = vector.shape_cast %26 : vector<48x128xbf16> to vector<1x48x128xbf16>
      tpu.vector_store %arg10[%27, %c0_21, %c0_22], %30 {strides = array<i32>} : memref<3x48x128xbf16, #tpu.memory_space<vmem>>, vector<1x48x128xbf16>,
    } else {
    }
    %c0 = arith.constant 0 : index
    %c0_3 = arith.constant 0 : index
    %6 = vector.load %arg9[%c0, %c0_3] : memref<16x128xf32, #tpu.memory_space<vmem>>, vector<16x128xf32>
    %c0_4 = arith.constant 0 : index
    %c0_5 = arith.constant 0 : index
    %c0_6 = arith.constant 0 : index
    %7 = vector.load %arg4[%c0_4, %c0_5, %c0_6] : memref<1x16x48xbf16, #tpu.memory_space<vmem>>, vector<1x16x48xbf16>
    %8 = vector.shape_cast %7 : vector<1x16x48xbf16> to vector<16x48xbf16>
    %9 = arith.index_cast %arg1 : i32 to index
    %c0_7 = arith.constant 0 : index
    %c0_8 = arith.constant 0 : index
    %10 = vector.load %arg10[%9, %c0_7, %c0_8] : memref<3x48x128xbf16, #tpu.memory_space<vmem>>, vector<1x48x128xbf16>
    %11 = vector.shape_cast %10 : vector<1x48x128xbf16> to vector<48x128xbf16>
    %cst = arith.constant dense<0.000000e+00> : vector<16x128xf32>
    %12 = tpu.matmul %8, %11, %cst {dimension_numbers = #tpu.dot_dimension_numbers<[1], [0], [0], [1], [0, 0, 1, 1], [], []>} : vector<16x48xbf16>, vector<48x128xbf16>, vector<16x128xf32> -> vector<16x128xf32>
    %13 = arith.addf %6, %12 : vector<16x128xf32>
    %c0_9 = arith.constant 0 : index
    %c0_10 = arith.constant 0 : index
    %14 = vector.load %arg9[%c0_9, %c0_10] : memref<16x128xf32, #tpu.memory_space<vmem>>, vector<16x128xf32>
    tpu.vector_store %arg9[%c0_9, %c0_10], %13 {strides = array<i32>} : memref<16x128xf32, #tpu.memory_space<vmem>>, vector<16x128xf32>,
    %c2_i32 = arith.constant 2 : i32
    %15 = arith.cmpi eq, %arg1, %c2_i32 : i32
    %16 = arith.extui %15 : i1 to i32
    %c0_i32_11 = arith.constant 0 : i32
    %17 = arith.cmpi ne, %16, %c0_i32_11 : i32
    scf.if %17 {
      %c0_12 = arith.constant 0 : index
      %c0_13 = arith.constant 0 : index
      %18 = vector.load %arg3[%c0_12, %c0_13] : memref<16x128xbf16, #tpu.memory_space<vmem>>, vector<16x128xbf16>
      %c0_14 = arith.constant 0 : index
      %c0_15 = arith.constant 0 : index
      %19 = vector.load %arg7[%c0_14, %c0_15] : memref<128x128xbf16, #tpu.memory_space<vmem>>, vector<128x128xbf16>
      %cst_16 = arith.constant dense<0.000000e+00> : vector<16x128xf32>
      %20 = tpu.matmul %18, %19, %cst_16 {dimension_numbers = #tpu.dot_dimension_numbers<[1], [0], [0], [1], [0, 0, 1, 1], [], []>} : vector<16x128xbf16>, vector<128x128xbf16>, vector<16x128xf32> -> vector<16x128xf32>
      %c0_17 = arith.constant 0 : index
      %c0_18 = arith.constant 0 : index
      %21 = vector.load %arg8[%c0_17, %c0_18] : memref<1x128xf32, #tpu.memory_space<vmem>>, vector<1x128xf32>
      %22 = vector.broadcast %21 : vector<1x128xf32> to vector<16x128xf32>
      %23 = arith.addf %20, %22 : vector<16x128xf32>
      %c0_19 = arith.constant 0 : index
      %c0_20 = arith.constant 0 : index
      %24 = vector.load %arg9[%c0_19, %c0_20] : memref<16x128xf32, #tpu.memory_space<vmem>>, vector<16x128xf32>
      %cst_21 = arith.constant 0.333333343 : f32
      %25 = vector.broadcast %cst_21 : f32 to vector<16x128xf32>
      %26 = arith.mulf %24, %25 : vector<16x128xf32>
      %27 = arith.addf %26, %23 : vector<16x128xf32>
      %c0_22 = arith.constant 0 : index
      %c0_23 = arith.constant 0 : index
      %28 = vector.load %arg9[%c0_22, %c0_23] : memref<16x128xf32, #tpu.memory_space<vmem>>, vector<16x128xf32>
      tpu.vector_store %arg9[%c0_22, %c0_23], %27 {strides = array<i32>} : memref<16x128xf32, #tpu.memory_space<vmem>>, vector<16x128xf32>,
    } else {
    }
    return
  }
  func.func @transform_0(%arg0: i32, %arg1: i32) -> (i32, i32) {
    %c0_i32 = arith.constant 0 : i32
    %c0_i32_0 = arith.constant 0 : i32
    %c0_i32_1 = arith.constant 0 : i32
    return %c0_i32, %c0_i32_0 : i32, i32
  }
  func.func @transform_1(%arg0: i32, %arg1: i32) -> (i32, i32) {
    %c0_i32 = arith.constant 0 : i32
    %c0_i32_0 = arith.constant 0 : i32
    return %arg0, %c0_i32 : i32, i32
  }
  func.func @transform_2(%arg0: i32, %arg1: i32) -> (i32, i32, i32) {
    %c0_i32 = arith.constant 0 : i32
    %c0_i32_0 = arith.constant 0 : i32
    return %arg1, %arg0, %c0_i32 : i32, i32, i32
  }
  func.func @transform_3(%arg0: i32, %arg1: i32) -> (i32, i32, i32) {
    %c0_i32 = arith.constant 0 : i32
    %c0_i32_0 = arith.constant 0 : i32
    %c0_i32_1 = arith.constant 0 : i32
    return %arg1, %c0_i32, %c0_i32_0 : i32, i32, i32
  }
  func.func @transform_4(%arg0: i32, %arg1: i32) -> (i32, i32, i32) {
    %c0_i32 = arith.constant 0 : i32
    %c0_i32_0 = arith.constant 0 : i32
    %c0_i32_1 = arith.constant 0 : i32
    return %arg1, %c0_i32, %c0_i32_0 : i32, i32, i32
  }
  func.func @transform_5(%arg0: i32, %arg1: i32) -> (i32, i32) {
    %c0_i32 = arith.constant 0 : i32
    %c0_i32_0 = arith.constant 0 : i32
    %c0_i32_1 = arith.constant 0 : i32
    return %c0_i32, %c0_i32_0 : i32, i32
  }
  func.func @transform_6(%arg0: i32, %arg1: i32) -> (i32, i32) {
    %c0_i32 = arith.constant 0 : i32
    %c0_i32_0 = arith.constant 0 : i32
    %c0_i32_1 = arith.constant 0 : i32
    return %c0_i32, %c0_i32_0 : i32, i32
  }
  func.func @transform_7(%arg0: i32, %arg1: i32) -> (i32, i32) {
    %c0_i32 = arith.constant 0 : i32
    %c0_i32_0 = arith.constant 0 : i32
    return %arg0, %c0_i32 : i32, i32
  }
}

</mosaic_0001>

<llo_original>
// kernel: tpu_custom_call.1
$region0: #{tpu_custom_call.1}
  #allocation0 [shape = 'u32[]', space=smem, size = 0x4, offset = 0x4, fixed_abs, tag = 'smem constant byte address 0x4 - core index']
  #allocation1 [shape = 'u32[144,128]{1,0:T(1,128)}', space=vmem, size = 0x12000, scoped, tag = 'internal scratch']
  #allocation2 [shape = 'bf16[3,48,128]{2,1,0:T(8,128)(2,1)}', space=vmem, size = 0x9000, scoped, tag = 'scratch operand']
  %s0 = inlined_call_operand.hbm [shape: bf16[48,128], index: 0, kind: input, shape index: {}]
  %s1 = inlined_call_operand.hbm [shape: bf16[48,128], index: 1, kind: input, shape index: {}]
  %s2 = inlined_call_operand.hbm [shape: bf16[3,48,48], index: 2, kind: input, shape index: {}]
  %s3 = inlined_call_operand.hbm [shape: bf16[3,128,128], index: 3, kind: input, shape index: {}]
  %s4 = inlined_call_operand.vmem [shape: f32[3,1,128], index: 4, kind: input, shape index: {}]
  %s5 = inlined_call_operand.hbm [shape: bf16[128,128], index: 5, kind: input, shape index: {}]
  %s6 = inlined_call_operand.vmem [shape: f32[1,128], index: 6, kind: input, shape index: {}]
  %s7 = inlined_call_operand.hbm [shape: f32[48,128], index: 7, kind: output, shape index: {}]
  %s8 = sld [smem:[#allocation0]]
  $region93: #{tpu_custom_call.1} parent=0
    _
  %s10 = ssub.s32 1, %s8
  %s11 = scalar_select 0, %s10, %s8
  $region1: #{tpu_custom_call.1} parent=0
    #allocation3 [shape = 'u8[12288]{0}', space=vmem, size = 0x3000, scoped, tag = 'input window, operand 0, single buffered']
    #allocation4 [shape = 's32[2]{0}', space=sflag, size = 0x8, scoped, tag = 'scoped memory for tpu_custom_call.1']
    #allocation5 [shape = 's32[2]{0}', space=sflag, size = 0x8, scoped, tag = 'scoped memory for tpu_custom_call.1']
    #allocation6 [shape = 'u8[8192]{0}', space=vmem, size = 0x2000, scoped, tag = 'input window, operand 1']
    #allocation7 [shape = 's32[2]{0}', space=sflag, size = 0x8, scoped, tag = 'scoped memory for tpu_custom_call.1']
    #allocation8 [shape = 'u8[8192]{0}', space=vmem, size = 0x2000, scoped, tag = 'input window, operand 2']
    #allocation9 [shape = 'u8[65536]{0}', space=vmem, size = 0x10000, scoped, tag = 'input window, operand 3']
    #allocation10 [shape = 's32[2]{0}', space=sflag, size = 0x8, scoped, tag = 'scoped memory for tpu_custom_call.1']
    #allocation11 [shape = 'u8[32768]{0}', space=vmem, size = 0x8000, scoped, tag = 'input window, operand 5, single buffered']
    #allocation12 [shape = 'u8[16384]{0}', space=vmem, size = 0x4000, scoped, tag = 'output window, operand 0']
    %12 = vsyncpa [#allocation4], 0
    %13 = vsyncpa [#allocation7], 0
    %s14 = scalar_lea.sflag [#allocation7], 1
    %15 = vsyncpa %s14, 0
    %16 = vsyncpa [#allocation10], 0
    %s17 = scalar_lea.sflag [#allocation10], 1
    %18 = vsyncpa %s17, 0
    %19 = vsyncpa [#allocation5], 0
    %s20 = scalar_lea.sflag [#allocation5], 1
    %21 = vsyncpa %s20, 0
    loop: start=0, step=1, limit=11
    $region2: #{tpu_custom_call.1} parent=1 // loop_pre_header
      _
    $region3: #{tpu_custom_call.1} parent=1 // loop_header
      %s23 = sphi 0, %s27
      %p24 = scmp.ge.s32.totalorder %s23, 11
      %s30 = sphi 0, %s42
      %s31 = sphi 0, %s38
      %s32 = sphi 0, %s30
      %s33 = sphi 0, %s31
      %s34 = sphi 0, %s32
      %s35 = sphi 0, %s33
      %s43 = sphi 0, %s43
      %s45 = sphi 0, %s43
      %s46 = sphi 0, %s45
      %s60 = sphi 0, %s46
      %s66 = sphi 0, %s68
      %s69 = sphi 0, %s66
      %s70 = sphi 0, %s69
      %s86 = sphi 0, %s70
      %s94 = sphi 0, %s96
      %s97 = sphi 0, %s94
      %s98 = sphi 0, %s97
      %s114 = sphi 0, %s98
      %s120 = sphi 0, %s122
      %s123 = sphi 0, %s120
      %s124 = sphi 0, %s123
      %s140 = sphi 0, %s124
      %s146 = sphi 0, %s148
      %s149 = sphi 0, %s146
      %s150 = sphi 0, %s149
      %s166 = sphi 0, %s150
      %s170 = sphi 0, %s170
      %s172 = sphi 0, %s170
      %s173 = sphi 0, %s172
      %s187 = sphi 0, %s173
      %s191 = sphi 0, %s191
      %s193 = sphi 0, %s191
      %s194 = sphi 0, %s193
      %s208 = sphi 0, %s194
      %s214 = sphi 0, %s216
      %s217 = sphi 0, %s214
      %s218 = sphi 0, %s217
      %s234 = sphi 0, %s218
    $region4: #{tpu_custom_call.1} parent=1 // loop_header_branch
      %26 = sbr.rel (%p24) target = $region8
    $region5: #{tpu_custom_call.1} parent=1 // loop_body
      %s28 = ssub.s32 %s23, 1
      %s29 = ssub.s32 %s23, 2
      %s36 = sadd.s32 1, %s31
      %p37 = scmp.ge.s32.totalorder %s36, 3
      %s38 = scalar_select %p37, 0, %s36
      %s39 = sadd.s32 1, %s30
      %s40 = scalar_select %p37, %s39, %s30
      %p41 = scmp.ge.s32.totalorder %s40, 3
      %s42 = scalar_select %p41, 0, %s40
      %s44 = sadd.s32 %s43, 1
      %p47 = scmp.eq.s32.totalorder %s23, 8
      %p48 = scmp.ne.s32.totalorder %s43, %s45
      %p49 = scmp.eq.s32.totalorder %s23, 0
      %p50 = por %p48, %p49
      %p51 = scmp.ne.s32.totalorder %s43, %s45
      %p52 = scmp.eq.s32.totalorder %s28, 8
      %p53 = por %p51, %p52
      %p54 = scmp.ne.s32.totalorder %s45, %s46
      %p55 = scmp.eq.s32.totalorder %s28, 0
      %p56 = por %p54, %p55
      %p57 = scmp.ne.s32.totalorder %s45, %s46
      %p58 = scmp.eq.s32.totalorder %s29, 8
      %p59 = por %p57, %p58
      %p61 = scmp.ne.s32.totalorder %s46, %s60
      %p62 = scmp.eq.s32.totalorder %s29, 0
      %p63 = por %p61, %p62
      %s64 = ssub.s32 %s30, %s42
      %p65 = scmp.eq.s32.totalorder %s64, 0
      %s67 = sadd.s32 %s66, 1
      %s68 = scalar_select %p65, %s66, %s67
      %p71 = pneg %p65
      %p72 = scmp.eq.s32.totalorder %s23, 8
      %p73 = por %p71, %p72
      %p74 = scmp.ne.s32.totalorder %s66, %s69
      %p75 = scmp.eq.s32.totalorder %s23, 0
      %p76 = por %p74, %p75
      %p77 = scmp.ne.s32.totalorder %s66, %s69
      %p78 = scmp.eq.s32.totalorder %s28, 8
      %p79 = por %p77, %p78
      %p80 = scmp.ne.s32.totalorder %s69, %s70
      %p81 = scmp.eq.s32.totalorder %s28, 0
      %p82 = por %p80, %p81
      %p83 = scmp.ne.s32.totalorder %s69, %s70
      %p84 = scmp.eq.s32.totalorder %s29, 8
      %p85 = por %p83, %p84
      %p87 = scmp.ne.s32.totalorder %s70, %s86
      %p88 = scmp.eq.s32.totalorder %s29, 0
      %p89 = por %p87, %p88
      %s90 = ssub.s32 %s31, %s38
      %s91 = ssub.s32 %s30, %s42
      %s92 = sor.u32 %s90, %s91
      %p93 = scmp.eq.s32.totalorder %s92, 0
      %s95 = sadd.s32 %s94, 1
      %s96 = scalar_select %p93, %s94, %s95
      %p99 = pneg %p93
      %p100 = scmp.eq.s32.totalorder %s23, 8
      %p101 = por %p99, %p100
      %p102 = scmp.ne.s32.totalorder %s94, %s97
      %p103 = scmp.eq.s32.totalorder %s23, 0
      %p104 = por %p102, %p103
      %p105 = scmp.ne.s32.totalorder %s94, %s97
      %p106 = scmp.eq.s32.totalorder %s28, 8
      %p107 = por %p105, %p106
      %p108 = scmp.ne.s32.totalorder %s97, %s98
      %p109 = scmp.eq.s32.totalorder %s28, 0
      %p110 = por %p108, %p109
      %p111 = scmp.ne.s32.totalorder %s97, %s98
      %p112 = scmp.eq.s32.totalorder %s29, 8
      %p113 = por %p111, %p112
      %p115 = scmp.ne.s32.totalorder %s98, %s114
      %p116 = scmp.eq.s32.totalorder %s29, 0
      %p117 = por %p115, %p116
      %s118 = ssub.s32 %s31, %s38
      %p119 = scmp.eq.s32.totalorder %s118, 0
      %s121 = sadd.s32 %s120, 1
      %s122 = scalar_select %p119, %s120, %s121
      %p125 = pneg %p119
      %p126 = scmp.eq.s32.totalorder %s23, 8
      %p127 = por %p125, %p126
      %p128 = scmp.ne.s32.totalorder %s120, %s123
      %p129 = scmp.eq.s32.totalorder %s23, 0
      %p130 = por %p128, %p129
      %p131 = scmp.ne.s32.totalorder %s120, %s123
      %p132 = scmp.eq.s32.totalorder %s28, 8
      %p133 = por %p131, %p132
      %p134 = scmp.ne.s32.totalorder %s123, %s124
      %p135 = scmp.eq.s32.totalorder %s28, 0
      %p136 = por %p134, %p135
      %p137 = scmp.ne.s32.totalorder %s123, %s124
      %p138 = scmp.eq.s32.totalorder %s29, 8
      %p139 = por %p137, %p138
      %p141 = scmp.ne.s32.totalorder %s124, %s140
      %p142 = scmp.eq.s32.totalorder %s29, 0
      %p143 = por %p141, %p142
      %s144 = ssub.s32 %s31, %s38
      %p145 = scmp.eq.s32.totalorder %s144, 0
      %s147 = sadd.s32 %s146, 1
      %s148 = scalar_select %p145, %s146, %s147
      %p151 = pneg %p145
      %p152 = scmp.eq.s32.totalorder %s23, 8
      %p153 = por %p151, %p152
      %p154 = scmp.ne.s32.totalorder %s146, %s149
      %p155 = scmp.eq.s32.totalorder %s23, 0
      %p156 = por %p154, %p155
      %p157 = scmp.ne.s32.totalorder %s146, %s149
      %p158 = scmp.eq.s32.totalorder %s28, 8
      %p159 = por %p157, %p158
      %p160 = scmp.ne.s32.totalorder %s149, %s150
      %p161 = scmp.eq.s32.totalorder %s28, 0
      %p162 = por %p160, %p161
      %p163 = scmp.ne.s32.totalorder %s149, %s150
      %p164 = scmp.eq.s32.totalorder %s29, 8
      %p165 = por %p163, %p164
      %p167 = scmp.ne.s32.totalorder %s150, %s166
      %p168 = scmp.eq.s32.totalorder %s29, 0
      %p169 = por %p167, %p168
      %s171 = sadd.s32 %s170, 1
      %p174 = scmp.eq.s32.totalorder %s23, 8
      %p175 = scmp.ne.s32.totalorder %s170, %s172
      %p176 = scmp.eq.s32.totalorder %s23, 0
      %p177 = por %p175, %p176
      %p178 = scmp.ne.s32.totalorder %s170, %s172
      %p179 = scmp.eq.s32.totalorder %s28, 8
      %p180 = por %p178, %p179
      %p181 = scmp.ne.s32.totalorder %s172, %s173
      %p182 = scmp.eq.s32.totalorder %s28, 0
      %p183 = por %p181, %p182
      %p184 = scmp.ne.s32.totalorder %s172, %s173
      %p185 = scmp.eq.s32.totalorder %s29, 8
      %p186 = por %p184, %p185
      %p188 = scmp.ne.s32.totalorder %s173, %s187
      %p189 = scmp.eq.s32.totalorder %s29, 0
      %p190 = por %p188, %p189
      %s192 = sadd.s32 %s191, 1
      %p195 = scmp.eq.s32.totalorder %s23, 8
      %p196 = scmp.ne.s32.totalorder %s191, %s193
      %p197 = scmp.eq.s32.totalorder %s23, 0
      %p198 = por %p196, %p197
      %p199 = scmp.ne.s32.totalorder %s191, %s193
      %p200 = scmp.eq.s32.totalorder %s28, 8
      %p201 = por %p199, %p200
      %p202 = scmp.ne.s32.totalorder %s193, %s194
      %p203 = scmp.eq.s32.totalorder %s28, 0
      %p204 = por %p202, %p203
      %p205 = scmp.ne.s32.totalorder %s193, %s194
      %p206 = scmp.eq.s32.totalorder %s29, 8
      %p207 = por %p205, %p206
      %p209 = scmp.ne.s32.totalorder %s194, %s208
      %p210 = scmp.eq.s32.totalorder %s29, 0
      %p211 = por %p209, %p210
      %s212 = ssub.s32 %s30, %s42
      %p213 = scmp.eq.s32.totalorder %s212, 0
      %s215 = sadd.s32 %s214, 1
      %s216 = scalar_select %p213, %s214, %s215
      %p219 = pneg %p213
      %p220 = scmp.eq.s32.totalorder %s23, 8
      %p221 = por %p219, %p220
      %p222 = scmp.ne.s32.totalorder %s214, %s217
      %p223 = scmp.eq.s32.totalorder %s23, 0
      %p224 = por %p222, %p223
      %p225 = scmp.ne.s32.totalorder %s214, %s217
      %p226 = scmp.eq.s32.totalorder %s28, 8
      %p227 = por %p225, %p226
      %p228 = scmp.ne.s32.totalorder %s217, %s218
      %p229 = scmp.eq.s32.totalorder %s28, 0
      %p230 = por %p228, %p229
      %p231 = scmp.ne.s32.totalorder %s217, %s218
      %p232 = scmp.eq.s32.totalorder %s29, 8
      %p233 = por %p231, %p232
      %p235 = scmp.ne.s32.totalorder %s218, %s234
      %p236 = scmp.eq.s32.totalorder %s29, 0
      %p237 = por %p235, %p236
      %p238 = scmp.le.s32.totalorder 1, %s23
      %p239 = scmp.lt.s32.totalorder %s23, 10
      %p240 = pnand %p238, %p239
      %p241 = pneg %p240
      // Predicated region
      $region9: #{tpu_custom_call.1} parent=5 // pred_check
        _
      $region10: #{tpu_custom_call.1} parent=5 // pred_check_branch
        %243 = sbr.rel (%p240) target = $region12
      $region11: #{tpu_custom_call.1} parent=5 // pred_region
        %s244 = ssub.s32 %s23, 1
        // Predicated region
        $region13: #{tpu_custom_call.1} parent=11 // pred_check
          %p245 = pneg %p56
        $region14: #{tpu_custom_call.1} parent=11 // pred_check_branch
          %247 = sbr.rel (%p245) target = $region16
        $region15: #{tpu_custom_call.1} parent=11 // pred_region
          %s249 = ssub.s32 384, 384
          %250 = vsyncadd [#allocation4], %s249
          %s251 = sshll.u32 [#allocation3], 4
          %s252 = int_to_ptr.vmem [resolvable:$true] %s251
          %257 = dma.hbm_to_vmem [thread:$0]  %s0, 384, %s252, [#allocation4], 64, 64, 4
        $region16: #{tpu_custom_call.1} parent=11 // pred_fallthru
          _
        // Predicated region
        $region17: #{tpu_custom_call.1} parent=11 // pred_check
          %p258 = pneg %p183
        $region18: #{tpu_custom_call.1} parent=11 // pred_check_branch
          %260 = sbr.rel (%p258) target = $region20
        $region19: #{tpu_custom_call.1} parent=11 // pred_region
          %s262 = ssub.s32 1024, 1024
          %263 = vsyncadd [#allocation10], %s262
          %s264 = sshll.u32 [#allocation11], 4
          %s265 = int_to_ptr.vmem [resolvable:$true] %s264
          %270 = dma.hbm_to_vmem [thread:$0]  %s5, 1024, %s265, [#allocation10], 64, 64, 4
        $region20: #{tpu_custom_call.1} parent=11 // pred_fallthru
          _
        // Predicated region
        $region21: #{tpu_custom_call.1} parent=11 // pred_check
          %p271 = pneg %p204
        $region22: #{tpu_custom_call.1} parent=11 // pred_check_branch
          %273 = sbr.rel (%p271) target = $region24
        $region23: #{tpu_custom_call.1} parent=11 // pred_region
          _
        $region24: #{tpu_custom_call.1} parent=11 // pred_fallthru
          _
      $region12: #{tpu_custom_call.1} parent=5 // pred_fallthru
        _
      %p274 = scmp.lt.s32.totalorder %s23, 9
      // Predicated region
      $region25: #{tpu_custom_call.1} parent=5 // pred_check
        %p275 = pneg %p274
      $region26: #{tpu_custom_call.1} parent=5 // pred_check_branch
        %277 = sbr.rel (%p275) target = $region28
      $region27: #{tpu_custom_call.1} parent=5 // pred_region
        // Predicated region
        $region29: #{tpu_custom_call.1} parent=27 // pred_check
          %p278 = pneg %p76
        $region30: #{tpu_custom_call.1} parent=27 // pred_check_branch
          %280 = sbr.rel (%p278) target = $region32
        $region31: #{tpu_custom_call.1} parent=27 // pred_region
          %s281 = sand.u32 %s23, 1
          %s282 = scalar_lea.sflag [#allocation7], %s281
          %s283 = sand.u32 %s66, 1
          %s284 = smul.addr %s283, 8
          %s285 = scalar_lea.vmem [#allocation6], %s284
          %s286 = smul.u32 2, %s30
          %s288 = ssub.s32 128, 128
          %289 = vsyncadd %s282, %s288
          %s290 = smul.addr %s286, 64
          %s291 = scalar_lea.hbm %s1, %s290
          %s292 = sshll.u32 %s285, 4
          %s293 = int_to_ptr.vmem [resolvable:$true] %s292
          %298 = dma.hbm_to_vmem [thread:$0]  %s291, 128, %s293, %s282, 64, 64, 4
        $region32: #{tpu_custom_call.1} parent=27 // pred_fallthru
          _
        // Predicated region
        $region33: #{tpu_custom_call.1} parent=27 // pred_check
          %p299 = pneg %p104
        $region34: #{tpu_custom_call.1} parent=27 // pred_check_branch
          %301 = sbr.rel (%p299) target = $region36
        $region35: #{tpu_custom_call.1} parent=27 // pred_region
          %s302 = sand.u32 %s23, 1
          %s303 = scalar_lea.sflag [#allocation7], %s302
          %s304 = sand.u32 %s94, 1
          %s305 = smul.addr %s304, 8
          %s306 = scalar_lea.vmem [#allocation8], %s305
          %s307 = smul.u32 2, %s30
          %s309 = ssub.s32 128, 128
          %310 = vsyncadd %s303, %s309
          %s311 = smul.addr %s31, 6
          %s312 = sadd.s32 %s307, %s311
          %s313 = smul.addr %s312, 64
          %s314 = scalar_lea.hbm %s2, %s313
          %s315 = sshll.u32 %s306, 4
          %s316 = int_to_ptr.vmem [resolvable:$true] %s315
          %321 = dma.hbm_to_vmem [thread:$0]  %s314, 128, %s316, %s303, 64, 64, 4
        $region36: #{tpu_custom_call.1} parent=27 // pred_fallthru
          _
        // Predicated region
        $region37: #{tpu_custom_call.1} parent=27 // pred_check
          %p322 = pneg %p130
        $region38: #{tpu_custom_call.1} parent=27 // pred_check_branch
          %324 = sbr.rel (%p322) target = $region40
        $region39: #{tpu_custom_call.1} parent=27 // pred_region
          %s325 = sand.u32 %s23, 1
          %s326 = scalar_lea.sflag [#allocation10], %s325
          %s327 = sand.u32 %s120, 1
          %s328 = smul.addr %s327, 64
          %s329 = scalar_lea.vmem [#allocation9], %s328
          %s331 = ssub.s32 1024, 1024
          %332 = vsyncadd %s326, %s331
          %s333 = smul.addr %s31, 16
          %s334 = smul.addr %s333, 64
          %s335 = scalar_lea.hbm %s3, %s334
          %s336 = sshll.u32 %s329, 4
          %s337 = int_to_ptr.vmem [resolvable:$true] %s336
          %342 = dma.hbm_to_vmem [thread:$0]  %s335, 1024, %s337, %s326, 64, 64, 4
        $region40: #{tpu_custom_call.1} parent=27 // pred_fallthru
          _
        // Predicated region
        $region41: #{tpu_custom_call.1} parent=27 // pred_check
          %p343 = pneg %p156
        $region42: #{tpu_custom_call.1} parent=27 // pred_check_branch
          %345 = sbr.rel (%p343) target = $region44
        $region43: #{tpu_custom_call.1} parent=27 // pred_region
          %p346 = scmp.lt.s32.totalorder %s31, 2
          %s347 = scalar_select %p346, %s31, 2
          %s348 = scalar_lea.vmem %s4, %s347
        $region44: #{tpu_custom_call.1} parent=27 // pred_fallthru
          _
      $region28: #{tpu_custom_call.1} parent=5 // pred_fallthru
        _
      %p349 = scmp.le.s32.totalorder 1, %s23
      %p350 = scmp.lt.s32.totalorder %s23, 10
      %p351 = pnand %p349, %p350
      %p352 = pneg %p351
      // Predicated region
      $region45: #{tpu_custom_call.1} parent=5 // pred_check
        _
      $region46: #{tpu_custom_call.1} parent=5 // pred_check_branch
        %354 = sbr.rel (%p351) target = $region48
      $region47: #{tpu_custom_call.1} parent=5 // pred_region
        %s355 = ssub.s32 %s23, 1
        // Predicated region
        $region49: #{tpu_custom_call.1} parent=47 // pred_check
          %p356 = pneg %p56
        $region50: #{tpu_custom_call.1} parent=47 // pred_check_branch
          %358 = sbr.rel (%p356) target = $region52
        $region51: #{tpu_custom_call.1} parent=47 // pred_region
          %359 = dma.done [#allocation4], 384
        $region52: #{tpu_custom_call.1} parent=47 // pred_fallthru
          _
        %s360 = sand.u32 %s28, 1
        %s361 = scalar_lea.sflag [#allocation7], %s360
        %s362 = sand.u32 %s69, 1
        %s363 = smul.addr %s362, 8
        %s364 = scalar_lea.vmem [#allocation6], %s363
        // Predicated region
        $region53: #{tpu_custom_call.1} parent=47 // pred_check
          %p365 = pneg %p82
        $region54: #{tpu_custom_call.1} parent=47 // pred_check_branch
          %367 = sbr.rel (%p365) target = $region56
        $region55: #{tpu_custom_call.1} parent=47 // pred_region
          %368 = dma.done %s361, 128
        $region56: #{tpu_custom_call.1} parent=47 // pred_fallthru
          _
        %s369 = sand.u32 %s28, 1
        %s370 = scalar_lea.sflag [#allocation7], %s369
        %s371 = sand.u32 %s97, 1
        %s372 = smul.addr %s371, 8
        %s373 = scalar_lea.vmem [#allocation8], %s372
        // Predicated region
        $region57: #{tpu_custom_call.1} parent=47 // pred_check
          %p374 = pneg %p110
        $region58: #{tpu_custom_call.1} parent=47 // pred_check_branch
          %376 = sbr.rel (%p374) target = $region60
        $region59: #{tpu_custom_call.1} parent=47 // pred_region
          %377 = dma.done %s370, 128
        $region60: #{tpu_custom_call.1} parent=47 // pred_fallthru
          _
        %s378 = sand.u32 %s28, 1
        %s379 = scalar_lea.sflag [#allocation10], %s378
        %s380 = sand.u32 %s123, 1
        %s381 = smul.addr %s380, 64
        %s382 = scalar_lea.vmem [#allocation9], %s381
        // Predicated region
        $region61: #{tpu_custom_call.1} parent=47 // pred_check
          %p383 = pneg %p136
        $region62: #{tpu_custom_call.1} parent=47 // pred_check_branch
          %385 = sbr.rel (%p383) target = $region64
        $region63: #{tpu_custom_call.1} parent=47 // pred_region
          %386 = dma.done %s379, 1024
        $region64: #{tpu_custom_call.1} parent=47 // pred_fallthru
          _
        // Predicated region
        $region65: #{tpu_custom_call.1} parent=47 // pred_check
          %p387 = pneg %p183
        $region66: #{tpu_custom_call.1} parent=47 // pred_check_branch
          %389 = sbr.rel (%p387) target = $region68
        $region67: #{tpu_custom_call.1} parent=47 // pred_region
          %390 = dma.done [#allocation10], 1024
        $region68: #{tpu_custom_call.1} parent=47 // pred_fallthru
          _
        %p391 = pneg %p56
        %p392 = pneg %p53
        %s393 = sand.u32 %s28, 1
        %s394 = scalar_lea.sflag [#allocation7], %s393
        %s395 = sand.u32 %s69, 1
        %s396 = smul.addr %s395, 8
        %s397 = scalar_lea.vmem [#allocation6], %s396
        %p398 = pneg %p82
        %p399 = pneg %p79
        %s400 = sand.u32 %s28, 1
        %s401 = scalar_lea.sflag [#allocation7], %s400
        %s402 = sand.u32 %s97, 1
        %s403 = smul.addr %s402, 8
        %s404 = scalar_lea.vmem [#allocation8], %s403
        %p405 = pneg %p110
        %p406 = pneg %p107
        %s407 = sand.u32 %s28, 1
        %s408 = scalar_lea.sflag [#allocation10], %s407
        %s409 = sand.u32 %s123, 1
        %s410 = smul.addr %s409, 64
        %s411 = scalar_lea.vmem [#allocation9], %s410
        %p412 = pneg %p136
        %p413 = pneg %p133
        %p414 = scmp.lt.s32.totalorder %s33, 2
        %s415 = scalar_select %p414, %s33, 2
        %s416 = scalar_lea.vmem %s4, %s415
        %p417 = pneg %p162
        %p418 = pneg %p159
        %p419 = pneg %p183
        %p420 = pneg %p180
        %p421 = pneg %p204
        %p422 = pneg %p201
        %p423 = pneg %p230
        %p424 = pneg %p227
        %s425 = sand.u32 %s217, 1
        %s426 = scalar_lea.sflag [#allocation5], %s425
        %s427 = sand.u32 %s217, 1
        %s428 = smul.addr %s427, 16
        %s429 = scalar_lea.vmem [#allocation12], %s428
        %s430 = smul.u32 2, %s32
        %s431 = smul.u32 2, %s32
        %p432 = scmp.lt.s32.totalorder %s33, 2
        %s433 = scalar_select %p432, %s33, 2
        %s434 = scalar_lea.vmem %s4, %s433
        %s435 = smul.u32 2, %s32
        %p437 = scmp.eq.s32.totalorder %s33, 0
        // Predicated region
        $region69: #{tpu_custom_call.1} parent=47 // pred_check
          %p438 = pneg %p437
        $region70: #{tpu_custom_call.1} parent=47 // pred_check_branch
          %440 = sbr.rel (%p438) target = $region72
        $region71: #{tpu_custom_call.1} parent=47 // pred_region
          %441 = vst [vmem:[%s429] sm:$0xff] 0.0
          %442 = vst [vmem:[%s429 + $0x8] sm:$0xff] 0.0
        $region72: #{tpu_custom_call.1} parent=47 // pred_fallthru
          _
        %p443 = scmp.eq.s32.totalorder %s32, 0
        // Predicated region
        $region73: #{tpu_custom_call.1} parent=47 // pred_check
          %p444 = pneg %p443
        $region74: #{tpu_custom_call.1} parent=47 // pred_check_branch
          %446 = sbr.rel (%p444) target = $region76
        $region75: #{tpu_custom_call.1} parent=47 // pred_region
          %v447 = vld [vmem:[#allocation3] sm:$0xf]
          %v448 = vld [vmem:[#allocation3 + $0x4] sm:$0xf]
          %v449 = vld [vmem:[#allocation3 + $0x8] sm:$0xf]
          %v450 = vld [vmem:[#allocation3 + $0xc] sm:$0xf]
          %v451 = vld [vmem:[#allocation3 + $0x10] sm:$0xf]
          %v452 = vld [vmem:[#allocation3 + $0x14] sm:$0xf]
          %v453 = vld [vmem:[%s382] sm:$0xf]
          %v454 = vld [vmem:[%s382 + $0x4] sm:$0xf]
          %v455 = vld [vmem:[%s382 + $0x8] sm:$0xf]
          %v456 = vld [vmem:[%s382 + $0xc] sm:$0xf]
          %v457 = vld [vmem:[%s382 + $0x10] sm:$0xf]
          %v458 = vld [vmem:[%s382 + $0x14] sm:$0xf]
          %v459 = vld [vmem:[%s382 + $0x18] sm:$0xf]
          %v460 = vld [vmem:[%s382 + $0x1c] sm:$0xf]
          %v461 = vld [vmem:[%s382 + $0x20] sm:$0xf]
          %v462 = vld [vmem:[%s382 + $0x24] sm:$0xf]
          %v463 = vld [vmem:[%s382 + $0x28] sm:$0xf]
          %v464 = vld [vmem:[%s382 + $0x2c] sm:$0xf]
          %v465 = vld [vmem:[%s382 + $0x30] sm:$0xf]
          %v466 = vld [vmem:[%s382 + $0x34] sm:$0xf]
          %v467 = vld [vmem:[%s382 + $0x38] sm:$0xf]
          %v468 = vld [vmem:[%s382 + $0x3c] sm:$0xf]
          %v469 = vld [vmem:[%s434] sm:$0x1]
          %v471 = vlaneseq
          %v472 = vshrl.u32 %v471, 7
          %v473 = vsub.s32 0, %v472
          %v474 = vrot.slane %v469, %v473
          %v482 = vunpack.c.l.b16 %v447
          %v483 = vunpack.c.l.b16 %v448
          %v484 = vunpack.c.l.b16 %v449
          %v485 = vunpack.c.l.b16 %v450
          %v486 = vunpack.c.l.b16 %v451
          %v487 = vunpack.c.l.b16 %v452
          %v488 = vpack.c.b16 %v483, %v482
          %v489 = vpack.c.b16 %v485, %v484
          %v490 = vpack.c.b16 %v487, %v486
          %v510 = vunpack.c.l.b16 %v453
          %v511 = vunpack.c.l.b16 %v454
          %v512 = vunpack.c.l.b16 %v455
          %v513 = vunpack.c.l.b16 %v456
          %v514 = vunpack.c.l.b16 %v457
          %v515 = vunpack.c.l.b16 %v458
          %v516 = vunpack.c.l.b16 %v459
          %v517 = vunpack.c.l.b16 %v460
          %v518 = vunpack.c.l.b16 %v461
          %v519 = vunpack.c.l.b16 %v462
          %v520 = vunpack.c.l.b16 %v463
          %v521 = vunpack.c.l.b16 %v464
          %v522 = vunpack.c.l.b16 %v465
          %v523 = vunpack.c.l.b16 %v466
          %v524 = vunpack.c.l.b16 %v467
          %v525 = vunpack.c.l.b16 %v468
          %v526 = vpack.c.b16 %v511, %v510
          %v527 = vpack.c.b16 %v513, %v512
          %v528 = vpack.c.b16 %v515, %v514
          %v529 = vpack.c.b16 %v517, %v516
          %v530 = vpack.c.b16 %v519, %v518
          %v531 = vpack.c.b16 %v521, %v520
          %v532 = vpack.c.b16 %v523, %v522
          %v533 = vpack.c.b16 %v525, %v524
          %542 = vmatprep.subr.bf16.mxu0 0
          %543 = vmatpush1.bf16.msra.mxu0 %v533
          %544 = vmatprep.subr.bf16.mxu0 0
          %545 = vmatpush1.bf16.msra.mxu0 %v532
          %546 = vmatprep.subr.bf16.mxu0 0
          %547 = vmatpush1.bf16.msra.mxu0 %v531
          %548 = vmatprep.subr.bf16.mxu0 0
          %549 = vmatpush1.bf16.msra.mxu0 %v530
          %550 = vmatprep.subr.bf16.mxu0 0
          %551 = vmatpush1.bf16.msra.mxu0 %v529
          %552 = vmatprep.subr.bf16.mxu0 0
          %553 = vmatpush1.bf16.msra.mxu0 %v528
          %554 = vmatprep.subr.bf16.mxu0 0
          %555 = vmatpush1.bf16.msra.mxu0 %v527
          %556 = vmatprep.subr.bf16.mxu0 0
          %557 = vmatpush1.bf16.msra.mxu0 %v526
          %558 = vmatprep.subr.bf16.mxu0 0
          %559 = vmatpush2.bf16.msra.mxu0 0
          %560 = vmatprep.subr.bf16.mxu0 0
          %561 = vmatpush2.bf16.msra.mxu0 0
          %562 = vmatprep.subr.bf16.mxu0 0
          %563 = vmatpush2.bf16.msra.mxu0 0
          %564 = vmatprep.subr.bf16.mxu0 0
          %565 = vmatpush2.bf16.msra.mxu0 0
          %566 = vmatprep.subr.bf16.mxu0 0
          %567 = vmatpush2.bf16.msra.mxu0 0
          %568 = vmatprep.subr.bf16.mxu0 0
          %569 = vmatpush2.bf16.msra.mxu0 0
          %570 = vmatprep.subr.bf16.mxu0 0
          %571 = vmatpush2.bf16.msra.mxu0 0
          %572 = vmatprep.subr.bf16.mxu0 0
          %573 = vmatpush2.bf16.msra.mxu0 0
          %574 = vmatprep.mubr.bf16.mxu0 0
          %575 = vmatmul.mubr.bf16.gmra.mxu0 %v488
          %v576 = vpop.f32.mrf.mxu0
          %v577 = vadd.f32 %v474, %v576
          %v578 = vpop.f32.mrf.mxu0
          %v579 = vpop.f32.mrf.mxu0
          %v580 = vadd.f32 %v474, %v579
          %v581 = vpop.f32.mrf.mxu0
          %582 = vmatprep.mubr.bf16.mxu0 0
          %583 = vmatmul.mubr.bf16.gmra.mxu0 %v489
          %v584 = vpop.f32.mrf.mxu0
          %v585 = vadd.f32 %v474, %v584
          %v586 = vpop.f32.mrf.mxu0
          %v587 = vpop.f32.mrf.mxu0
          %v588 = vadd.f32 %v474, %v587
          %v589 = vpop.f32.mrf.mxu0
          %590 = vmatprep.mubr.bf16.mxu0 0
          %591 = vmatmul.mubr.bf16.gmra.mxu0 %v490
          %v592 = vpop.f32.mrf.mxu0
          %v593 = vadd.f32 %v474, %v592
          %v594 = vpop.f32.mrf.mxu0
          %v595 = vpop.f32.mrf.mxu0
          %v596 = vadd.f32 %v474, %v595
          %v597 = vpop.f32.mrf.mxu0
          %598 = vdwg.mxu0
          %v599 = vpack.c.bf16 %v580, %v577
          %v600 = vpack.c.bf16 %v588, %v585
          %v601 = vpack.c.bf16 %v596, %v593
          %v605 = vunpack.c.l.b16 %v599
          %v606 = vunpack.c.h.b16 %v599
          %v607 = vunpack.c.l.b16 %v600
          %v608 = vunpack.c.h.b16 %v600
          %v609 = vunpack.c.l.b16 %v601
          %v610 = vunpack.c.h.b16 %v601
          %v611 = vpack.c.b16 %v605, %v605
          %v612 = vpack.c.b16 %v606, %v606
          %v613 = vpack.c.b16 %v607, %v607
          %v614 = vpack.c.b16 %v608, %v608
          %v615 = vpack.c.b16 %v609, %v609
          %v616 = vpack.c.b16 %v610, %v610
          %s623 = smul.u32 %s33, 6
          %s624 = smul.addr %s623, 4
          %s625 = scalar_lea.vmem [#allocation2], %s624
          %626 = vst [vmem:[%s625] sm:$0xf] %v611
          %627 = vst [vmem:[%s625 + $0x4] sm:$0xf] %v612
          %628 = vst [vmem:[%s625 + $0x8] sm:$0xf] %v613
          %629 = vst [vmem:[%s625 + $0xc] sm:$0xf] %v614
          %630 = vst [vmem:[%s625 + $0x10] sm:$0xf] %v615
          %631 = vst [vmem:[%s625 + $0x14] sm:$0xf] %v616
        $region76: #{tpu_custom_call.1} parent=47 // pred_fallthru
          _
        %v632 = vld [vmem:[%s429] sm:$0xff]
        %v633 = vld [vmem:[%s429 + $0x8] sm:$0xff]
        %v634 = vld [vmem:[%s373] sm:$0xf]
        %v635 = vld [vmem:[%s373 + $0x4] sm:$0xf]
        %s636 = smul.u32 %s33, 6
        %s637 = smul.addr %s636, 4
        %s638 = scalar_lea.vmem [#allocation2], %s637
        %v639 = vld [vmem:[%s638] sm:$0xf]
        %v640 = vld [vmem:[%s638 + $0x4] sm:$0xf]
        %v641 = vld [vmem:[%s638 + $0x8] sm:$0xf]
        %v642 = vld [vmem:[%s638 + $0xc] sm:$0xf]
        %v643 = vld [vmem:[%s638 + $0x10] sm:$0xf]
        %v644 = vld [vmem:[%s638 + $0x14] sm:$0xf]
        %v647 = vunpack.c.l.b16 %v634
        %v648 = vunpack.c.l.b16 %v635
        %v649 = vpack.c.b16 %v648, %v647
        %v656 = vunpack.c.l.b16 %v639
        %v657 = vunpack.c.l.b16 %v640
        %v658 = vunpack.c.l.b16 %v641
        %v659 = vunpack.c.l.b16 %v642
        %v660 = vunpack.c.l.b16 %v643
        %v661 = vunpack.c.l.b16 %v644
        %v662 = vpack.c.b16 %v657, %v656
        %v663 = vpack.c.b16 %v659, %v658
        %v664 = vpack.c.b16 %v661, %v660
        %vm668 = vcmask 392192
        %v670 = vsel %vm668, %v649, 0
        %672 = vmatprep.subr.bf16.mxu0 0
        %673 = vmatpush1.bf16.msra.mxu0 0
        %674 = vmatprep.subr.bf16.mxu0 0
        %675 = vmatpush1.bf16.msra.mxu0 0
        %676 = vmatprep.subr.bf16.mxu0 0
        %677 = vmatpush1.bf16.msra.mxu0 0
        %678 = vmatprep.subr.bf16.mxu0 0
        %679 = vmatpush1.bf16.msra.mxu0 0
        %680 = vmatprep.subr.bf16.mxu0 0
        %681 = vmatpush1.bf16.msra.mxu0 0
        %682 = vmatprep.subr.bf16.mxu0 0
        %683 = vmatpush1.bf16.msra.mxu0 %v664
        %684 = vmatprep.subr.bf16.mxu0 0
        %685 = vmatpush1.bf16.msra.mxu0 %v663
        %686 = vmatprep.subr.bf16.mxu0 0
        %687 = vmatpush1.bf16.msra.mxu0 %v662
        %688 = vmatprep.subr.bf16.mxu0 0
        %689 = vmatpush2.bf16.msra.mxu0 0
        %690 = vmatprep.subr.bf16.mxu0 0
        %691 = vmatpush2.bf16.msra.mxu0 0
        %692 = vmatprep.subr.bf16.mxu0 0
        %693 = vmatpush2.bf16.msra.mxu0 0
        %694 = vmatprep.subr.bf16.mxu0 0
        %695 = vmatpush2.bf16.msra.mxu0 0
        %696 = vmatprep.subr.bf16.mxu0 0
        %697 = vmatpush2.bf16.msra.mxu0 0
        %698 = vmatprep.subr.bf16.mxu0 0
        %699 = vmatpush2.bf16.msra.mxu0 0
        %700 = vmatprep.subr.bf16.mxu0 0
        %701 = vmatpush2.bf16.msra.mxu0 0
        %702 = vmatprep.subr.bf16.mxu0 0
        %703 = vmatpush2.bf16.msra.mxu0 0
        %704 = vmatprep.mubr.bf16.mxu0 0
        %705 = vmatmul.mubr.bf16.gmra.mxu0 %v670
        %v706 = vpop.f32.mrf.mxu0
        %v707 = vadd.f32 0.0, %v706
        %v708 = vpop.f32.mrf.mxu0
        %v709 = vpop.f32.mrf.mxu0
        %v710 = vadd.f32 0.0, %v709
        %v711 = vpop.f32.mrf.mxu0
        %712 = vdwg.mxu0
        %v713 = vadd.f32 %v632, %v707
        %v714 = vadd.f32 %v633, %v710
        %715 = vst [vmem:[%s429] sm:$0xff] %v713
        %716 = vst [vmem:[%s429 + $0x8] sm:$0xff] %v714
        %p717 = scmp.eq.s32.totalorder %s33, 2
        // Predicated region
        $region77: #{tpu_custom_call.1} parent=47 // pred_check
          %p718 = pneg %p717
        $region78: #{tpu_custom_call.1} parent=47 // pred_check_branch
          %720 = sbr.rel (%p718) target = $region80
        $region79: #{tpu_custom_call.1} parent=47 // pred_region
          %v721 = vld [vmem:[%s364] sm:$0xf]
          %v722 = vld [vmem:[%s364 + $0x4] sm:$0xf]
          %v723 = vld [vmem:[#allocation11] sm:$0xf]
          %v724 = vld [vmem:[#allocation11 + $0x4] sm:$0xf]
          %v725 = vld [vmem:[#allocation11 + $0x8] sm:$0xf]
          %v726 = vld [vmem:[#allocation11 + $0xc] sm:$0xf]
          %v727 = vld [vmem:[#allocation11 + $0x10] sm:$0xf]
          %v728 = vld [vmem:[#allocation11 + $0x14] sm:$0xf]
          %v729 = vld [vmem:[#allocation11 + $0x18] sm:$0xf]
          %v730 = vld [vmem:[#allocation11 + $0x1c] sm:$0xf]
          %v731 = vld [vmem:[#allocation11 + $0x20] sm:$0xf]
          %v732 = vld [vmem:[#allocation11 + $0x24] sm:$0xf]
          %v733 = vld [vmem:[#allocation11 + $0x28] sm:$0xf]
          %v734 = vld [vmem:[#allocation11 + $0x2c] sm:$0xf]
          %v735 = vld [vmem:[#allocation11 + $0x30] sm:$0xf]
          %v736 = vld [vmem:[#allocation11 + $0x34] sm:$0xf]
          %v737 = vld [vmem:[#allocation11 + $0x38] sm:$0xf]
          %v738 = vld [vmem:[#allocation11 + $0x3c] sm:$0xf]
          %v739 = vld [vmem:[%s6] sm:$0x1]
          %v741 = vlaneseq
          %v742 = vshrl.u32 %v741, 7
          %v743 = vsub.s32 0, %v742
          %v744 = vrot.slane %v739, %v743
          %v748 = vunpack.c.l.b16 %v721
          %v749 = vunpack.c.l.b16 %v722
          %v750 = vpack.c.b16 %v749, %v748
          %v768 = vunpack.c.l.b16 %v723
          %v769 = vunpack.c.l.b16 %v724
          %v770 = vunpack.c.l.b16 %v725
          %v771 = vunpack.c.l.b16 %v726
          %v772 = vunpack.c.l.b16 %v727
          %v773 = vunpack.c.l.b16 %v728
          %v774 = vunpack.c.l.b16 %v729
          %v775 = vunpack.c.l.b16 %v730
          %v776 = vunpack.c.l.b16 %v731
          %v777 = vunpack.c.l.b16 %v732
          %v778 = vunpack.c.l.b16 %v733
          %v779 = vunpack.c.l.b16 %v734
          %v780 = vunpack.c.l.b16 %v735
          %v781 = vunpack.c.l.b16 %v736
          %v782 = vunpack.c.l.b16 %v737
          %v783 = vunpack.c.l.b16 %v738
          %v784 = vpack.c.b16 %v769, %v768
          %v785 = vpack.c.b16 %v771, %v770
          %v786 = vpack.c.b16 %v773, %v772
          %v787 = vpack.c.b16 %v775, %v774
          %v788 = vpack.c.b16 %v777, %v776
          %v789 = vpack.c.b16 %v779, %v778
          %v790 = vpack.c.b16 %v781, %v780
          %v791 = vpack.c.b16 %v783, %v782
          %800 = vmatprep.subr.bf16.mxu0 0
          %801 = vmatpush1.bf16.msra.mxu0 %v791
          %802 = vmatprep.subr.bf16.mxu0 0
          %803 = vmatpush1.bf16.msra.mxu0 %v790
          %804 = vmatprep.subr.bf16.mxu0 0
          %805 = vmatpush1.bf16.msra.mxu0 %v789
          %806 = vmatprep.subr.bf16.mxu0 0
          %807 = vmatpush1.bf16.msra.mxu0 %v788
          %808 = vmatprep.subr.bf16.mxu0 0
          %809 = vmatpush1.bf16.msra.mxu0 %v787
          %810 = vmatprep.subr.bf16.mxu0 0
          %811 = vmatpush1.bf16.msra.mxu0 %v786
          %812 = vmatprep.subr.bf16.mxu0 0
          %813 = vmatpush1.bf16.msra.mxu0 %v785
          %814 = vmatprep.subr.bf16.mxu0 0
          %815 = vmatpush1.bf16.msra.mxu0 %v784
          %816 = vmatprep.subr.bf16.mxu0 0
          %817 = vmatpush2.bf16.msra.mxu0 0
          %818 = vmatprep.subr.bf16.mxu0 0
          %819 = vmatpush2.bf16.msra.mxu0 0
          %820 = vmatprep.subr.bf16.mxu0 0
          %821 = vmatpush2.bf16.msra.mxu0 0
          %822 = vmatprep.subr.bf16.mxu0 0
          %823 = vmatpush2.bf16.msra.mxu0 0
          %824 = vmatprep.subr.bf16.mxu0 0
          %825 = vmatpush2.bf16.msra.mxu0 0
          %826 = vmatprep.subr.bf16.mxu0 0
          %827 = vmatpush2.bf16.msra.mxu0 0
          %828 = vmatprep.subr.bf16.mxu0 0
          %829 = vmatpush2.bf16.msra.mxu0 0
          %830 = vmatprep.subr.bf16.mxu0 0
          %831 = vmatpush2.bf16.msra.mxu0 0
          %832 = vmatprep.mubr.bf16.mxu0 0
          %833 = vmatmul.mubr.bf16.gmra.mxu0 %v750
          %v834 = vpop.f32.mrf.mxu0
          %v835 = vadd.f32 %v744, %v834
          %v836 = vpop.f32.mrf.mxu0
          %v837 = vpop.f32.mrf.mxu0
          %v838 = vadd.f32 %v744, %v837
          %v839 = vpop.f32.mrf.mxu0
          %840 = vdwg.mxu0
          %v841 = vld [vmem:[%s429] sm:$0xff]
          %v842 = vld [vmem:[%s429 + $0x8] sm:$0xff]
          %v843 = vmul.f32 %v841, 0.33333334
          %v844 = vmul.f32 %v842, 0.33333334
          %v845 = vadd.f32 %v843, %v835
          %v846 = vadd.f32 %v844, %v838
          %847 = vst [vmem:[%s429] sm:$0xff] %v845
          %848 = vst [vmem:[%s429 + $0x8] sm:$0xff] %v846
        $region80: #{tpu_custom_call.1} parent=47 // pred_fallthru
          _
        %s849 = sand.u32 %s217, 1
        %s850 = scalar_lea.sflag [#allocation5], %s849
        %s851 = sand.u32 %s217, 1
        %s852 = smul.addr %s851, 16
        %s853 = scalar_lea.vmem [#allocation12], %s852
        // Predicated region
        $region81: #{tpu_custom_call.1} parent=47 // pred_check
          %p854 = pneg %p227
        $region82: #{tpu_custom_call.1} parent=47 // pred_check_branch
          %856 = sbr.rel (%p854) target = $region84
        $region83: #{tpu_custom_call.1} parent=47 // pred_region
          %s857 = smul.u32 2, %s32
          %s859 = ssub.s32 256, 256
          %860 = vsyncadd %s850, %s859
          %s861 = smul.addr %s857, 128
          %s862 = scalar_lea.hbm %s7, %s861
          %s863 = sshll.u32 %s853, 4
          %s864 = int_to_ptr.vmem [resolvable:$true] %s863
          %869 = dma.vmem_to_hbm [thread:$0]  %s864, 256, %s862, %s850, 128, 128, 8
        $region84: #{tpu_custom_call.1} parent=47 // pred_fallthru
          _
      $region48: #{tpu_custom_call.1} parent=5 // pred_fallthru
        _
      %p870 = scmp.le.s32.totalorder 2, %s23
      // Predicated region
      $region85: #{tpu_custom_call.1} parent=5 // pred_check
        %p871 = pneg %p870
      $region86: #{tpu_custom_call.1} parent=5 // pred_check_branch
        %873 = sbr.rel (%p871) target = $region88
      $region87: #{tpu_custom_call.1} parent=5 // pred_region
        %s874 = ssub.s32 %s23, 2
        // Predicated region
        $region89: #{tpu_custom_call.1} parent=87 // pred_check
          %p875 = pneg %p233
        $region90: #{tpu_custom_call.1} parent=87 // pred_check_branch
          %877 = sbr.rel (%p875) target = $region92
        $region91: #{tpu_custom_call.1} parent=87 // pred_region
          %s878 = sand.u32 %s218, 1
          %s879 = scalar_lea.sflag [#allocation5], %s878
          %s880 = sand.u32 %s218, 1
          %s881 = smul.addr %s880, 16
          %s882 = scalar_lea.vmem [#allocation12], %s881
          %883 = dma.done %s879, 256
        $region92: #{tpu_custom_call.1} parent=87 // pred_fallthru
          _
      $region88: #{tpu_custom_call.1} parent=5 // pred_fallthru
        _
    $region6: #{tpu_custom_call.1} parent=1 // loop_footer
      %s27 = sadd.s32 1, %s23
    $region7: #{tpu_custom_call.1} parent=1 // loop_footer_branch
      %22 = sbr.rel target = $region3
    $region8: #{tpu_custom_call.1} parent=1 // loop_exit
      _
    %884 = vsyncpa [#allocation4], 1
    %s885 = scalar_lea.sflag [#allocation4], 1
    %886 = vsyncpa %s885, 1
    %887 = vsyncpa [#allocation7], 1
    %s888 = scalar_lea.sflag [#allocation7], 1
    %889 = vsyncpa %s888, 1
    %890 = vsyncpa [#allocation10], 1
    %s891 = scalar_lea.sflag [#allocation10], 1
    %892 = vsyncpa %s891, 1
    %893 = vsyncpa [#allocation5], 1
    %s894 = scalar_lea.sflag [#allocation5], 1
    %895 = vsyncpa %s894, 1

</llo_original>
